<compile_context>
chip_gen: v5e
topology: v5e:2x2
jax: 0.10.0
libtpu: 0.0.40
codegen_flags: <defaults>
</compile_context>

<pallas_src>
import functools

import jax
import jax.numpy as jnp
from jax.experimental import pallas as pl
from jax.experimental.pallas import tpu as pltpu

LANE = 128          # lane width: all output feature dims padded to this
B_TILE = 8          # batch rows per grid step (one f32 vreg of output)
NEG_INF = -1e30     # class-mask value folded into the final bias pad lanes


def _ceil_to(n, m):
    return -(-n // m) * m


def _faust_kernel(x_ref, w_ref, b_ref, o_ref, *, k_dims):
    """x_ref: (B_TILE, k0)      f32  -- x[:, :, 0], zero-padded to k0 lanes.
    w_ref: (k0+k1+k2, LANE)  bf16 -- weights stacked along rows, 16-aligned.
    b_ref: (3*B_TILE, LANE)  f32  -- biases, each replicated over 8 rows;
                                     final-layer pad lanes hold -1e30.
    o_ref: (B_TILE, LANE)    f32  -- log-probabilities (pad lanes ~ -1e30).
    """
    k0, k1, k2 = k_dims
    x0 = x_ref[...].astype(jnp.bfloat16)                       # (8, k0)

    # ---- backbone: pointwise Conv1d(C_in -> D0, k=1) + ReLU, point 0 only --
    w0 = w_ref[0:k0, :]                                        # (k0, 128) bf16
    h = jnp.dot(x0, w0, preferred_element_type=jnp.float32)
    h = jnp.maximum(h + b_ref[0:B_TILE, :], 0.0)               # (8, 128) f32

    # ---- post_process: Linear -> ReLU -> Dropout (identity at inference) ---
    # TODO(synk): training-mode dropout (pltpu.prng_* masking) not applied.
    w1 = w_ref[k0:k0 + k1, :]                                  # (k1, 128) bf16
    h = jnp.dot(h[:, :k1].astype(jnp.bfloat16), w1,
                preferred_element_type=jnp.float32)
    h = jnp.maximum(h + b_ref[B_TILE:2 * B_TILE, :], 0.0)

    # ---- final Linear (class mask pre-folded into its bias pad lanes) ------
    w2 = w_ref[k0 + k1:k0 + k1 + k2, :]                        # (k2, 128) bf16
    logits = jnp.dot(h[:, :k2].astype(jnp.bfloat16), w2,
                     preferred_element_type=jnp.float32)
    logits = logits + b_ref[2 * B_TILE:3 * B_TILE, :]

    # ---- log_softmax over lanes (pad lanes are -1e30 -> exp underflows) ----
    m = jnp.max(logits, axis=1, keepdims=True)
    z = logits - m
    lse = jnp.log(jnp.sum(jnp.exp(z), axis=1, keepdims=True))
    o_ref[...] = (z - lse).astype(o_ref.dtype)


def pack_params(params):
    """Pack (w_bb, b_bb, w1, b1, w2, b2) into:
      * one bf16 weight slab, fan-in rows rounded up to 16 per layer,
      * one f32 bias slab, each bias replicated across B_TILE rows, with the
        final layer's pad lanes set to NEG_INF (class mask folded in).
    Returns (w_slab, b_slab, k_dims)."""
    w_bb, b_bb, w1, b1, w2, b2 = params
    ws = [w_bb, w1, w2]
    bs = [b_bb, b1, b2]
    k_dims = tuple(_ceil_to(w.shape[0], 16) for w in ws)

    w_slab = jnp.zeros((sum(k_dims), LANE), jnp.float32)
    r = 0
    for w, k in zip(ws, k_dims):
        fi, fo = w.shape
        assert fi <= k and fo <= LANE
        w_slab = w_slab.at[r:r + fi, :fo].set(w)
        r += k
    w_slab = w_slab.astype(jnp.bfloat16)

    b_slab = jnp.zeros((3 * B_TILE, LANE), jnp.float32)
    for i, b in enumerate(bs):
        fo = b.shape[0]
        fill = NEG_INF if i == len(bs) - 1 else 0.0
        row = jnp.full((LANE,), fill, jnp.float32).at[:fo].set(b)
        b_slab = b_slab.at[i * B_TILE:(i + 1) * B_TILE, :].set(
            jnp.broadcast_to(row, (B_TILE, LANE)))
    return w_slab, b_slab, k_dims


def faust_classifier_forward(x_ncw, w_slab, b_slab, k_dims, n_classes):
    """x_ncw: (B, C_in, N) float32 in the PyTorch NCW conv layout."""
    B, C_in, _ = x_ncw.shape
    k0, k1, k2 = k_dims
    num_tiles = pl.cdiv(B, B_TILE)
    b_pad = num_tiles * B_TILE

    # The backbone is pointwise, so only x[:, :, 0] matters: slice first and
    # skip the NCW transpose and the other N-1 points entirely.
    x0 = x_ncw[:, :, 0]                                        # (B, C_in)
    x_pad = jnp.zeros((b_pad, k0), jnp.float32).at[:B, :C_in].set(x0)

    cost = pl.CostEstimate(
        flops=2 * b_pad * LANE * (k0 + k1 + k2),
        transcendentals=b_pad * (LANE + 1),
        bytes_accessed=(x_pad.size * 4 + w_slab.size * 2 + b_slab.size * 4
                        + b_pad * LANE * 4))

    out_pad = pl.pallas_call(
        functools.partial(_faust_kernel, k_dims=k_dims),
        out_shape=jax.ShapeDtypeStruct((b_pad, LANE), jnp.float32),
        grid=(num_tiles,),
        in_specs=[
            pl.BlockSpec((B_TILE, k0), lambda i: (i, 0)),      # batch tiles
            pl.BlockSpec(w_slab.shape, lambda i: (0, 0)),      # resident weights
            pl.BlockSpec(b_slab.shape, lambda i: (0, 0)),      # resident biases
        ],
        out_specs=pl.BlockSpec((B_TILE, LANE), lambda i: (i, 0)),
        compiler_params=pltpu.CompilerParams(
            dimension_semantics=("parallel",)),
        cost_estimate=cost,
    )(x_pad, w_slab, b_slab)
    return out_pad[:B, :n_classes]


def init_params(key, c_in, dims):
    """nn.Linear-style init: U(-1/sqrt(fan_in), 1/sqrt(fan_in)).
    Weights are stored (in, out) for right-multiplication."""
    d0, d1, d2 = dims
    ks = jax.random.split(key, 6)

    def lin(kw, kb, fan_in, fan_out):
        bound = 1.0 / jnp.sqrt(jnp.float32(fan_in))
        w = jax.random.uniform(kw, (fan_in, fan_out), jnp.float32, -bound, bound)
        b = jax.random.uniform(kb, (fan_out,), jnp.float32, -bound, bound)
        return w, b

    w_bb, b_bb = lin(ks[0], ks[1], c_in, d0)   # backbone 1x1 conv
    w1, b1 = lin(ks[2], ks[3], d0, d1)         # post_process Linear 0
    w2, b2 = lin(ks[4], ks[5], d1, d2)         # final Linear
    return (w_bb, b_bb, w1, b1, w2, b2)


def reference_forward(x_ncw, params):
    """Pure-JAX reference mirroring the kernel's bf16-weight / f32-acc math."""
    w_bb, b_bb, w1, b1, w2, b2 = params
    x0 = x_ncw[:, :, 0].astype(jnp.bfloat16)
    h = jax.nn.relu(jnp.dot(x0, w_bb.astype(jnp.bfloat16),
                            preferred_element_type=jnp.float32) + b_bb)
    h = jax.nn.relu(jnp.dot(h.astype(jnp.bfloat16), w1.astype(jnp.bfloat16),
                            preferred_element_type=jnp.float32) + b1)
    logits = (jnp.dot(h.astype(jnp.bfloat16), w2.astype(jnp.bfloat16),
                      preferred_element_type=jnp.float32) + b2)
    return jax.nn.log_softmax(logits, axis=1)


if __name__ == "__main__":
    B, C_in, N = 2, 4, 16                      # (batch, channels, points) NCW
    post_process_dims = (32, 64, 10)           # dims[0] == backbone.out_dim
    n_classes = post_process_dims[-1]

    key = jax.random.PRNGKey(0)
    k_x, k_p = jax.random.split(key)
    x = jax.random.normal(k_x, (B, C_in, N), jnp.float32)
    params = init_params(k_p, C_in, post_process_dims)
    w_slab, b_slab, k_dims = pack_params(params)   # pad + pack ONCE at init

    out = faust_classifier_forward(x, w_slab, b_slab, k_dims, n_classes)
    out = jax.block_until_ready(out)

    # sanity: shape, normalized log-probabilities, and reference agreement
    assert out.shape == (B, n_classes)
    row_sums = jnp.sum(jnp.exp(out), axis=1)
    assert jnp.allclose(row_sums, jnp.ones_like(row_sums), atol=1e-4)
    ref = reference_forward(x, params)
    assert jnp.allclose(out, ref, atol=2e-2, rtol=2e-2)

    print("KERNEL_OK")
</pallas_src>

<mosaic_0001>
module attributes {stable_mosaic.version = 11 : i64} {
  func.func @_faust_kernel(%arg0: i32, %arg1: memref<8x16xf32, #tpu.memory_space<vmem>>, %arg2: memref<112x128xbf16, #tpu.memory_space<vmem>>, %arg3: memref<24x128xf32, #tpu.memory_space<vmem>>, %arg4: memref<8x128xf32, #tpu.memory_space<vmem>>) attributes {dimension_semantics = [#tpu.dimension_semantics<parallel>], iteration_bounds = array<i64: 1>, scalar_prefetch = 0 : i64, scratch_operands = 0 : i64, tpu.core_type = #tpu.core_type<tc>, window_params = [{transform_indices = @transform_0, window_bounds = array<i64: 8, 16>}, {pipeline_mode = #tpu.pipeline_mode<synchronous>, transform_indices = @transform_1, window_bounds = array<i64: 112, 128>}, {pipeline_mode = #tpu.pipeline_mode<synchronous>, transform_indices = @transform_2, window_bounds = array<i64: 24, 128>}, {transform_indices = @transform_3, window_bounds = array<i64: 8, 128>}]} {
    %c0 = arith.constant 0 : index
    %c0_0 = arith.constant 0 : index
    %0 = vector.load %arg1[%c0, %c0_0] : memref<8x16xf32, #tpu.memory_space<vmem>>, vector<8x16xf32>
    %1 = arith.truncf %0 : vector<8x16xf32> to vector<8x16xbf16>
    %c0_1 = arith.constant 0 : index
    %c0_2 = arith.constant 0 : index
    %2 = vector.load %arg2[%c0_1, %c0_2] : memref<112x128xbf16, #tpu.memory_space<vmem>>, vector<16x128xbf16>
    %cst = arith.constant dense<0.000000e+00> : vector<8x128xf32>
    %3 = tpu.matmul %1, %2, %cst {dimension_numbers = #tpu.dot_dimension_numbers<[1], [0], [0], [1], [0, 0, 1, 1], [], []>} : vector<8x16xbf16>, vector<16x128xbf16>, vector<8x128xf32> -> vector<8x128xf32>
    %c0_3 = arith.constant 0 : index
    %c0_4 = arith.constant 0 : index
    %4 = vector.load %arg3[%c0_3, %c0_4] : memref<24x128xf32, #tpu.memory_space<vmem>>, vector<8x128xf32>
    %5 = arith.addf %3, %4 : vector<8x128xf32>
    %cst_5 = arith.constant 0.000000e+00 : f32
    %6 = vector.broadcast %cst_5 : f32 to vector<8x128xf32>
    %7 = arith.maximumf %5, %6 : vector<8x128xf32>
    %c16 = arith.constant 16 : index
    %c0_6 = arith.constant 0 : index
    %8 = vector.load %arg2[%c16, %c0_6] : memref<112x128xbf16, #tpu.memory_space<vmem>>, vector<32x128xbf16>
    %9 = vector.extract_strided_slice %7 {offsets = [0, 0], sizes = [8, 32], strides = [1, 1]} : vector<8x128xf32> to vector<8x32xf32>
    %10 = arith.truncf %9 : vector<8x32xf32> to vector<8x32xbf16>
    %cst_7 = arith.constant dense<0.000000e+00> : vector<8x128xf32>
    %11 = tpu.matmul %10, %8, %cst_7 {dimension_numbers = #tpu.dot_dimension_numbers<[1], [0], [0], [1], [0, 0, 1, 1], [], []>} : vector<8x32xbf16>, vector<32x128xbf16>, vector<8x128xf32> -> vector<8x128xf32>
    %c8 = arith.constant 8 : index
    %c0_8 = arith.constant 0 : index
    %12 = vector.load %arg3[%c8, %c0_8] : memref<24x128xf32, #tpu.memory_space<vmem>>, vector<8x128xf32>
    %13 = arith.addf %11, %12 : vector<8x128xf32>
    %cst_9 = arith.constant 0.000000e+00 : f32
    %14 = vector.broadcast %cst_9 : f32 to vector<8x128xf32>
    %15 = arith.maximumf %13, %14 : vector<8x128xf32>
    %c48 = arith.constant 48 : index
    %c0_10 = arith.constant 0 : index
    %16 = vector.load %arg2[%c48, %c0_10] : memref<112x128xbf16, #tpu.memory_space<vmem>>, vector<64x128xbf16>
    %17 = vector.extract_strided_slice %15 {offsets = [0, 0], sizes = [8, 64], strides = [1, 1]} : vector<8x128xf32> to vector<8x64xf32>
    %18 = arith.truncf %17 : vector<8x64xf32> to vector<8x64xbf16>
    %cst_11 = arith.constant dense<0.000000e+00> : vector<8x128xf32>
    %19 = tpu.matmul %18, %16, %cst_11 {dimension_numbers = #tpu.dot_dimension_numbers<[1], [0], [0], [1], [0, 0, 1, 1], [], []>} : vector<8x64xbf16>, vector<64x128xbf16>, vector<8x128xf32> -> vector<8x128xf32>
    %c16_12 = arith.constant 16 : index
    %c0_13 = arith.constant 0 : index
    %20 = vector.load %arg3[%c16_12, %c0_13] : memref<24x128xf32, #tpu.memory_space<vmem>>, vector<8x128xf32>
    %21 = arith.addf %19, %20 : vector<8x128xf32>
    %cst_14 = arith.constant dense<0xFF800000> : vector<8xf32>
    %22 = vector.multi_reduction <maximumf>, %21, %cst_14 [1] : vector<8x128xf32> to vector<8xf32>
    %23 = vector.shape_cast %22 : vector<8xf32> to vector<8x1xf32>
    %24 = vector.broadcast %23 : vector<8x1xf32> to vector<8x128xf32>
    %25 = arith.subf %21, %24 : vector<8x128xf32>
    %26 = math.exp %25 : vector<8x128xf32>
    %cst_15 = arith.constant dense<0.000000e+00> : vector<8xf32>
    %27 = vector.multi_reduction <add>, %26, %cst_15 [1] : vector<8x128xf32> to vector<8xf32>
    %28 = vector.shape_cast %27 : vector<8xf32> to vector<8x1xf32>
    %29 = math.log %28 : vector<8x1xf32>
    %30 = vector.broadcast %29 : vector<8x1xf32> to vector<8x128xf32>
    %31 = arith.subf %25, %30 : vector<8x128xf32>
    %c0_16 = arith.constant 0 : index
    %c0_17 = arith.constant 0 : index
    %32 = vector.load %arg4[%c0_16, %c0_17] : memref<8x128xf32, #tpu.memory_space<vmem>>, vector<8x128xf32>
    tpu.vector_store %arg4[%c0_16, %c0_17], %31 {strides = array<i32>} : memref<8x128xf32, #tpu.memory_space<vmem>>, vector<8x128xf32>,
    return
  }
  func.func @transform_0(%arg0: i32) -> (i32, i32) {
    %c0_i32 = arith.constant 0 : i32
    %c0_i32_0 = arith.constant 0 : i32
    return %arg0, %c0_i32 : i32, i32
  }
  func.func @transform_1(%arg0: i32) -> (i32, i32) {
    %c0_i32 = arith.constant 0 : i32
    %c0_i32_0 = arith.constant 0 : i32
    %c0_i32_1 = arith.constant 0 : i32
    return %c0_i32, %c0_i32_0 : i32, i32
  }
  func.func @transform_2(%arg0: i32) -> (i32, i32) {
    %c0_i32 = arith.constant 0 : i32
    %c0_i32_0 = arith.constant 0 : i32
    %c0_i32_1 = arith.constant 0 : i32
    return %c0_i32, %c0_i32_0 : i32, i32
  }
  func.func @transform_3(%arg0: i32) -> (i32, i32) {
    %c0_i32 = arith.constant 0 : i32
    %c0_i32_0 = arith.constant 0 : i32
    return %arg0, %c0_i32 : i32, i32
  }
}

</mosaic_0001>

<llo_original>
// kernel: tpu_custom_call.1
$region0: #{tpu_custom_call.1}
  #allocation0 [shape = 'u32[]', space=smem, size = 0x4, offset = 0x4, fixed_abs, tag = 'smem constant byte address 0x4 - core index']
  #allocation1 [shape = 'u32[72,128]{1,0:T(1,128)}', space=vmem, size = 0x9000, scoped, tag = 'internal scratch']
  %s0 = inlined_call_operand.hbm [shape: f32[8,16], index: 0, kind: input, shape index: {}]
  %s1 = inlined_call_operand.hbm [shape: bf16[112,128], index: 1, kind: input, shape index: {}]
  %s2 = inlined_call_operand.hbm [shape: f32[24,128], index: 2, kind: input, shape index: {}]
  %s3 = inlined_call_operand.hbm [shape: f32[8,128], index: 3, kind: output, shape index: {}]
  %s4 = sld [smem:[#allocation0]]
  $region34: #{tpu_custom_call.1} parent=0
    _
  %s6 = ssub.s32 1, %s4
  %s7 = scalar_select 0, %s6, %s4
  $region1: #{tpu_custom_call.1} parent=0
    #allocation2 [shape = 'u8[4096]{0}', space=vmem, size = 0x1000, scoped, tag = 'input window, operand 0, single buffered']
    #allocation3 [shape = 's32[1]{0}', space=sflag, size = 0x4, scoped, tag = 'scoped memory for tpu_custom_call.1']
    #allocation4 [shape = 's32[1]{0}', space=sflag, size = 0x4, scoped, tag = 'scoped memory for tpu_custom_call.1']
    #allocation5 [shape = 'u8[28672]{0}', space=vmem, size = 0x7000, scoped, tag = 'input window, operand 1, single buffered']
    #allocation6 [shape = 's32[1]{0}', space=sflag, size = 0x4, scoped, tag = 'scoped memory for tpu_custom_call.1']
    #allocation7 [shape = 'u8[12288]{0}', space=vmem, size = 0x3000, scoped, tag = 'input window, operand 2, single buffered']
    #allocation8 [shape = 'u8[4096]{0}', space=vmem, size = 0x1000, scoped, tag = 'output window, operand 0, single buffered']
    %8 = vsyncpa [#allocation3], 0
    %9 = vsyncpa [#allocation6], 0
    %10 = vsyncpa [#allocation4], 0
    // Predicated region
    $region2: #{tpu_custom_call.1} parent=1 // pred_check
      _
    $region3: #{tpu_custom_call.1} parent=1 // pred_check_branch
      %12 = sbr.rel (0) target = $region5
    $region4: #{tpu_custom_call.1} parent=1 // pred_region
      %14 = vsyncadd [#allocation3], 0
      %s16 = sshll.u32 %s0, 4
      %s17 = int_to_ptr.hbm [resolvable:$true] %s16
      %s18 = sshll.u32 [#allocation2], 4
      %s19 = int_to_ptr.vmem [resolvable:$true] %s18
      %21 = dma.hbm_to_vmem [thread:$0]  %s17, 128, %s19, [#allocation3]
    $region5: #{tpu_custom_call.1} parent=1 // pred_fallthru
      _
    // Predicated region
    $region6: #{tpu_custom_call.1} parent=1 // pred_check
      _
    $region7: #{tpu_custom_call.1} parent=1 // pred_check_branch
      %23 = sbr.rel (0) target = $region9
    $region8: #{tpu_custom_call.1} parent=1 // pred_region
      %25 = vsyncadd [#allocation6], 0
      %s26 = sshll.u32 %s1, 4
      %s27 = int_to_ptr.hbm [resolvable:$true] %s26
      %s28 = sshll.u32 [#allocation5], 4
      %s29 = int_to_ptr.vmem [resolvable:$true] %s28
      %34 = dma.hbm_to_vmem [thread:$0]  %s27, 896, %s29, [#allocation6], 64, 64, 4
    $region9: #{tpu_custom_call.1} parent=1 // pred_fallthru
      _
    // Predicated region
    $region10: #{tpu_custom_call.1} parent=1 // pred_check
      _
    $region11: #{tpu_custom_call.1} parent=1 // pred_check_branch
      %36 = sbr.rel (0) target = $region13
    $region12: #{tpu_custom_call.1} parent=1 // pred_region
      %38 = vsyncadd [#allocation6], 0
      %s39 = sshll.u32 %s2, 4
      %s40 = int_to_ptr.hbm [resolvable:$true] %s39
      %s41 = sshll.u32 [#allocation7], 4
      %s42 = int_to_ptr.vmem [resolvable:$true] %s41
      %47 = dma.hbm_to_vmem [thread:$0]  %s40, 384, %s42, [#allocation6], 128, 128, 8
    $region13: #{tpu_custom_call.1} parent=1 // pred_fallthru
      _
    // Predicated region
    $region14: #{tpu_custom_call.1} parent=1 // pred_check
      _
    $region15: #{tpu_custom_call.1} parent=1 // pred_check_branch
      %49 = sbr.rel (0) target = $region17
    $region16: #{tpu_custom_call.1} parent=1 // pred_region
      %51 = dma.done [#allocation3], 128
    $region17: #{tpu_custom_call.1} parent=1 // pred_fallthru
      _
    // Predicated region
    $region18: #{tpu_custom_call.1} parent=1 // pred_check
      _
    $region19: #{tpu_custom_call.1} parent=1 // pred_check_branch
      %53 = sbr.rel (0) target = $region21
    $region20: #{tpu_custom_call.1} parent=1 // pred_region
      %55 = dma.done [#allocation6], 896
    $region21: #{tpu_custom_call.1} parent=1 // pred_fallthru
      _
    // Predicated region
    $region22: #{tpu_custom_call.1} parent=1 // pred_check
      _
    $region23: #{tpu_custom_call.1} parent=1 // pred_check_branch
      %57 = sbr.rel (0) target = $region25
    $region24: #{tpu_custom_call.1} parent=1 // pred_region
      %59 = dma.done [#allocation6], 384
    $region25: #{tpu_custom_call.1} parent=1 // pred_fallthru
      _
    %v61 = vld [vmem:[#allocation2] sm:$0xff]
    %v62 = vpack.c.bf16 %v61, %v61
    %v63 = vld [vmem:[#allocation5] sm:$0xf]
    %v64 = vld [vmem:[#allocation5 + $0x4] sm:$0xf]
    %v65 = vld [vmem:[#allocation7] sm:$0xff]
    %v68 = vunpack.c.l.b16 %v63
    %v69 = vunpack.c.l.b16 %v64
    %v70 = vpack.c.b16 %v69, %v68
    %vm72 = vcmask 130048
    %v74 = vsel %vm72, %v62, 0
    %76 = vmatpush.bf16.msra.mxu0 0
    %77 = vmatpush.bf16.msra.mxu0 0
    %78 = vmatpush.bf16.msra.mxu0 0
    %79 = vmatpush.bf16.msra.mxu0 0
    %80 = vmatpush.bf16.msra.mxu0 0
    %81 = vmatpush.bf16.msra.mxu0 0
    %82 = vmatpush.bf16.msra.mxu0 0
    %83 = vmatpush.bf16.msra.mxu0 %v70
    %84 = vmatmul.bf16.gmra.mxu0 %v74
    %v85 = vpop.f32.mrf.mxu0
    %v86 = vadd.f32 %v65, %v85
    %v87 = vpop.f32.mrf.mxu0
    %88 = vdwg.mxu0
    %v89 = vmax.f32 %v86, 0.0
    %v90 = vld [vmem:[#allocation5 + $0x8] sm:$0xf]
    %v91 = vld [vmem:[#allocation5 + $0xc] sm:$0xf]
    %v92 = vld [vmem:[#allocation5 + $0x10] sm:$0xf]
    %v93 = vld [vmem:[#allocation5 + $0x14] sm:$0xf]
    %v94 = vpack.c.bf16 %v89, %v89
    %v95 = vld [vmem:[#allocation7 + $0x8] sm:$0xff]
    %v100 = vunpack.c.l.b16 %v90
    %v101 = vunpack.c.l.b16 %v91
    %v102 = vunpack.c.l.b16 %v92
    %v103 = vunpack.c.l.b16 %v93
    %v104 = vpack.c.b16 %v101, %v100
    %v105 = vpack.c.b16 %v103, %v102
    %vm108 = vcmask 261120
    %v110 = vsel %vm108, %v94, 0
    %112 = vmatpush.bf16.msra.mxu0 0
    %113 = vmatpush.bf16.msra.mxu0 0
    %114 = vmatpush.bf16.msra.mxu0 0
    %115 = vmatpush.bf16.msra.mxu0 0
    %116 = vmatpush.bf16.msra.mxu0 0
    %117 = vmatpush.bf16.msra.mxu0 0
    %118 = vmatpush.bf16.msra.mxu0 %v105
    %119 = vmatpush.bf16.msra.mxu0 %v104
    %120 = vmatmul.bf16.gmra.mxu0 %v110
    %v121 = vpop.f32.mrf.mxu0
    %v122 = vadd.f32 %v95, %v121
    %v123 = vpop.f32.mrf.mxu0
    %124 = vdwg.mxu0
    %v125 = vmax.f32 %v122, 0.0
    %v126 = vld [vmem:[#allocation5 + $0x18] sm:$0xf]
    %v127 = vld [vmem:[#allocation5 + $0x1c] sm:$0xf]
    %v128 = vld [vmem:[#allocation5 + $0x20] sm:$0xf]
    %v129 = vld [vmem:[#allocation5 + $0x24] sm:$0xf]
    %v130 = vld [vmem:[#allocation5 + $0x28] sm:$0xf]
    %v131 = vld [vmem:[#allocation5 + $0x2c] sm:$0xf]
    %v132 = vld [vmem:[#allocation5 + $0x30] sm:$0xf]
    %v133 = vld [vmem:[#allocation5 + $0x34] sm:$0xf]
    %v134 = vpack.c.bf16 %v125, %v125
    %v135 = vld [vmem:[#allocation7 + $0x10] sm:$0xff]
    %v144 = vunpack.c.l.b16 %v126
    %v145 = vunpack.c.l.b16 %v127
    %v146 = vunpack.c.l.b16 %v128
    %v147 = vunpack.c.l.b16 %v129
    %v148 = vunpack.c.l.b16 %v130
    %v149 = vunpack.c.l.b16 %v131
    %v150 = vunpack.c.l.b16 %v132
    %v151 = vunpack.c.l.b16 %v133
    %v152 = vpack.c.b16 %v145, %v144
    %v153 = vpack.c.b16 %v147, %v146
    %v154 = vpack.c.b16 %v149, %v148
    %v155 = vpack.c.b16 %v151, %v150
    %vm160 = vcmask 523264
    %v162 = vsel %vm160, %v134, 0
    %164 = vmatpush.bf16.msra.mxu0 0
    %165 = vmatpush.bf16.msra.mxu0 0
    %166 = vmatpush.bf16.msra.mxu0 0
    %167 = vmatpush.bf16.msra.mxu0 0
    %168 = vmatpush.bf16.msra.mxu0 %v155
    %169 = vmatpush.bf16.msra.mxu0 %v154
    %170 = vmatpush.bf16.msra.mxu0 %v153
    %171 = vmatpush.bf16.msra.mxu0 %v152
    %172 = vmatmul.bf16.gmra.mxu0 %v162
    %v173 = vpop.f32.mrf.mxu0
    %v174 = vadd.f32 %v135, %v173
    %v175 = vpop.f32.mrf.mxu0
    %176 = vdwg.mxu0
    %177 = vmax.xlane.f32.xlu0 %v174
    %v178 = vpop.xlane.xlu0 %177
    %v179 = vsub.f32 %v174, %v178
    %v180 = vmul.f32 %v179, 1.442695
    %v181 = vpow.pop %v180
    %182 = vadd.xlane.f32.xlu0 %v181
    %v183 = vpop.xlane.xlu0 %182
    %v184 = vlog2.pop %v183
    %v185 = vmul.f32 %v184, 0.6931472
    %v186 = vsub.f32 %v179, %v185
    %187 = vst [vmem:[#allocation8] sm:$0xff] %v186
    // Predicated region
    $region26: #{tpu_custom_call.1} parent=1 // pred_check
      _
    $region27: #{tpu_custom_call.1} parent=1 // pred_check_branch
      %189 = sbr.rel (0) target = $region29
    $region28: #{tpu_custom_call.1} parent=1 // pred_region
      %191 = vsyncadd [#allocation4], 0
      %s193 = sshll.u32 [#allocation8], 4
      %s194 = int_to_ptr.vmem [resolvable:$true] %s193
      %s195 = sshll.u32 %s3, 4
      %s196 = int_to_ptr.hbm [resolvable:$true] %s195
      %198 = dma.vmem_to_hbm [thread:$0]  %s194, 128, %s196, [#allocation4]
    $region29: #{tpu_custom_call.1} parent=1 // pred_fallthru
      _
    // Predicated region
    $region30: #{tpu_custom_call.1} parent=1 // pred_check
      _
    $region31: #{tpu_custom_call.1} parent=1 // pred_check_branch
      %200 = sbr.rel (0) target = $region33
    $region32: #{tpu_custom_call.1} parent=1 // pred_region
      %202 = dma.done [#allocation4], 128
    $region33: #{tpu_custom_call.1} parent=1 // pred_fallthru
      _
    %203 = vsyncpa [#allocation3], 1
    %204 = vsyncpa [#allocation6], 1
    %205 = vsyncpa [#allocation4], 1

</llo_original>
